<compile_context>
chip_gen: v7x
topology: tpu7x:2x2x1
jax: 0.10.0
libtpu: 0.0.40
codegen_flags: <defaults>
</compile_context>

<pallas_src>
import functools
import math

import jax
import jax.numpy as jnp
from jax.experimental import pallas as pl
from jax.experimental.pallas import tpu as pltpu


def _division_body(x_ref, y_ref, p_ref, o_ref):
    """Fused K1/K2: out[f] = ratio[f] * exp(-r2 * delta[f]).

    x_ref: (D, tr, 128) VMEM points
    y_ref: (D,) SMEM scalars  OR  (D, tr, 128) VMEM per-point y
    p_ref: (2*F,) SMEM scalars: [ratio_0..ratio_{F-1}, delta_0..delta_{F-1}]
    o_ref: (F, tr, 128) VMEM output
    """
    D = x_ref.shape[0]
    F = o_ref.shape[0]
    r2 = None
    for d in range(D):                        # static unroll, pure VPU adds
        dd = x_ref[d] - y_ref[d]
        sq = dd * dd
        r2 = sq if r2 is None else r2 + sq
    for f in range(F):                        # static unroll, one exp (EUP) per f
        o_ref[f] = (p_ref[f] * jnp.exp(-(r2 * p_ref[F + f]))).astype(o_ref.dtype)


def _cdiv(a, b):
    return -(-a // b)


def _vmem_budget_bytes():
    """Conservative VMEM budget under the default scoped limit per generation."""
    try:
        kind = jax.devices()[0].device_kind.lower()
    except Exception:
        kind = ""
    if ("v6" in kind) or ("v7" in kind):
        return 20 << 20   # 32 MiB default scoped VMEM on v6e / v7x
    return 10 << 20       # 16 MiB default scoped VMEM on v5e and older


def _pick_tiling(n_rows, d, f, streamed_y, budget_bytes):
    """Pick (rows-of-128-points per block, grid steps, padded row count)."""
    # Bytes per row of 128 points across all double-buffered VMEM streams.
    bytes_per_row = (d + f + (d if streamed_y else 0)) * 128 * 4 * 2
    tr_cap = max(8, (budget_bytes // bytes_per_row) // 8 * 8)
    # >= 2 steps when there is plenty of work: lets the "parallel" grid axis
    # shard across both TensorCores on v7x; negligible overhead on 1-TC parts.
    min_steps = 2 if n_rows >= 256 else 1
    steps = max(min_steps, _cdiv(n_rows, tr_cap))
    tr = max(8, _cdiv(_cdiv(n_rows, steps), 8) * 8)   # sublane multiple
    return tr, steps, steps * tr


@functools.partial(
    jax.jit, static_argnames=("out_dtype", "lane_major_output", "tile_rows"))
def division_kernel_forward(x, y, sigma1, scale1, sigma2, scale2, *,
                            out_dtype=jnp.float32, lane_major_output=False,
                            tile_rows=None):
    """Computes K1(x, y) / K2(x, y) for Gaussian K1, K2 with a Pallas TPU kernel.

    x: (..., D) coordinates. y: scalar, (D,) vector, or broadcastable to x.
    sigma*/scale*: arrays of shape F_shape.
    Returns (..., *F_shape) by default, or (*F_shape, N) lane-major (skips the
    wrapper-side output transpose) when lane_major_output=True.
    """
    x = jnp.asarray(x, jnp.float32)
    F_shape = sigma1.shape
    D = x.shape[-1]
    lead_shape = x.shape[:-1]
    F = math.prod(F_shape)

    xf = x.reshape(-1, D)                     # (N, D)
    N = xf.shape[0]
    n_rows = _cdiv(N, 128)                    # 128 points per lane-row

    # y: scalar / per-coordinate -> SMEM scalars; per-point -> streamed tiles.
    y_arr = jnp.asarray(y, jnp.float32)
    smem_y = (y_arr.ndim == 0) or (y_arr.shape in ((1,), (D,)))

    if tile_rows is None:
        tr, steps, rows_pad = _pick_tiling(n_rows, D, F, not smem_y,
                                           _vmem_budget_bytes())
    else:
        tr = max(8, (int(tile_rows) // 8) * 8)
        steps = _cdiv(n_rows, tr)
        rows_pad = steps * tr
    n_pad = rows_pad * 128

    # Pack points lane-dense as (D, rows_pad, 128). The transpose is one XLA
    # copy of the 8 B/pt input (accepted as the smaller relayout cost).
    if n_pad != N:
        xf = jnp.pad(xf, ((0, n_pad - N), (0, 0)))
    xt = xf.T.reshape(D, rows_pad, 128)

    if smem_y:
        y_in = jnp.broadcast_to(y_arr.reshape(-1), (D,)).astype(jnp.float32)
        y_spec = pl.BlockSpec(memory_space=pltpu.MemorySpace.SMEM)
    else:
        yf = jnp.broadcast_to(y_arr, x.shape).astype(jnp.float32).reshape(-1, D)
        if n_pad != N:
            yf = jnp.pad(yf, ((0, n_pad - N), (0, 0)))
        y_in = yf.T.reshape(D, rows_pad, 128)
        y_spec = pl.BlockSpec((D, tr, 128), lambda i: (0, i, 0))

    # Fused params: ratio = scale1/scale2, delta = 1/(2 s1^2) - 1/(2 s2^2)
    # (single exp + mul per output element, no divide), kept as SMEM scalars.
    s1 = jnp.asarray(sigma1, jnp.float32).reshape(F)
    s2 = jnp.asarray(sigma2, jnp.float32).reshape(F)
    ratio = (jnp.asarray(scale1, jnp.float32) /
             jnp.asarray(scale2, jnp.float32)).reshape(F)
    delta = 1.0 / (2.0 * s1 * s1) - 1.0 / (2.0 * s2 * s2)
    params = jnp.concatenate([ratio, delta])          # (2*F,)
    p_spec = pl.BlockSpec(memory_space=pltpu.MemorySpace.SMEM)

    x_spec = pl.BlockSpec((D, tr, 128), lambda i: (0, i, 0))
    o_spec = pl.BlockSpec((F, tr, 128), lambda i: (0, i, 0))

    out = pl.pallas_call(
        _division_body,
        out_shape=jax.ShapeDtypeStruct((F, rows_pad, 128), out_dtype),
        grid_spec=pltpu.PrefetchScalarGridSpec(
            num_scalar_prefetch=0,
            grid=(steps,),
            in_specs=[x_spec, y_spec, p_spec],
            out_specs=o_spec,
        ),
        compiler_params=pltpu.CompilerParams(
            dimension_semantics=("parallel",)),
    )(xt, y_in, params)

    if lane_major_output:
        res = out.reshape(*F_shape, n_pad)
        return res[..., :N] if n_pad != N else res

    res = out.reshape(F, n_pad)
    if n_pad != N:
        res = res[:, :N]
    # Layout plumbing back to the module's canonical (..., *F_shape).
    return res.T.reshape(*lead_shape, *F_shape)


def _reference(x, y, sigma1, scale1, sigma2, scale2):
    x = jnp.asarray(x, jnp.float32)
    diff = jnp.asarray(y, jnp.float32) - x
    r2 = jnp.sum(diff * diff, axis=-1)[..., None, None]      # (..., 1, 1)
    k1 = scale1 * jnp.exp(-r2 / (2.0 * sigma1 ** 2))
    k2 = scale2 * jnp.exp(-r2 / (2.0 * sigma2 ** 2))
    return k1 / k2


if __name__ == "__main__":
    key = jax.random.PRNGKey(0)

    # Small grid of points on a D=2 manifold: (16, 16) spatial, 2 coordinates.
    x = jax.random.uniform(key, (16, 16, 2), jnp.float32, minval=-1.0, maxval=1.0)

    # Deterministic parameters for the two Gaussian sub-kernels, F_shape = (2, 2).
    sigma1 = jnp.array([[1.0, 1.5], [2.0, 0.8]], jnp.float32)
    scale1 = jnp.array([[1.0, 0.5], [0.3, 0.9]], jnp.float32)
    sigma2 = jnp.array([[2.0, 2.5], [3.0, 1.8]], jnp.float32)
    scale2 = jnp.array([[0.7, 0.4], [0.6, 1.1]], jnp.float32)

    # 1) Default forward(x, y=0): scalar y via SMEM, canonical output layout.
    out = division_kernel_forward(x, 0.0, sigma1, scale1, sigma2, scale2)
    out = jax.block_until_ready(out)
    ref = _reference(x, 0.0, sigma1, scale1, sigma2, scale2)
    assert out.shape == (16, 16, 2, 2), out.shape
    assert jnp.allclose(out, ref, rtol=1e-5, atol=1e-5), "mismatch vs reference (scalar y)"

    # 2) Per-point y: streamed lane-dense like x.
    y_pts = jax.random.uniform(jax.random.PRNGKey(1), (16, 16, 2), jnp.float32,
                               minval=-1.0, maxval=1.0)
    out2 = jax.block_until_ready(
        division_kernel_forward(x, y_pts, sigma1, scale1, sigma2, scale2))
    ref2 = _reference(x, y_pts, sigma1, scale1, sigma2, scale2)
    assert out2.shape == (16, 16, 2, 2), out2.shape
    assert jnp.allclose(out2, ref2, rtol=1e-5, atol=1e-5), "mismatch vs reference (per-point y)"

    # 3) Lane-major output (no wrapper output transpose): (*F_shape, N).
    out3 = jax.block_until_ready(
        division_kernel_forward(x, 0.0, sigma1, scale1, sigma2, scale2,
                                lane_major_output=True))
    assert out3.shape == (2, 2, 256), out3.shape
    assert jnp.allclose(out3.reshape(4, 256).T.reshape(16, 16, 2, 2), ref,
                        rtol=1e-5, atol=1e-5), "mismatch vs reference (lane-major)"

    print("KERNEL_OK")
</pallas_src>

<mosaic_0001>
module attributes {stable_mosaic.version = 11 : i64} {
  func.func @_division_body(%arg0: i32, %arg1: memref<2x8x128xf32, #tpu.memory_space<vmem>>, %arg2: memref<2xf32, #tpu.memory_space<smem>>, %arg3: memref<8xf32, #tpu.memory_space<smem>>, %arg4: memref<4x8x128xf32, #tpu.memory_space<vmem>>) attributes {dimension_semantics = [#tpu.dimension_semantics<parallel>], iteration_bounds = array<i64: 1>, scalar_prefetch = 0 : i64, scratch_operands = 0 : i64, tpu.core_type = #tpu.core_type<tc>, window_params = [{transform_indices = @transform_0, window_bounds = array<i64: 2, 8, 128>}, {transform_indices = @transform_1, window_bounds = array<i64: 2>}, {transform_indices = @transform_2, window_bounds = array<i64: 8>}, {transform_indices = @transform_3, window_bounds = array<i64: 4, 8, 128>}]} {
    %c0 = arith.constant 0 : index
    %c0_0 = arith.constant 0 : index
    %c0_1 = arith.constant 0 : index
    %0 = vector.load %arg1[%c0, %c0_0, %c0_1] : memref<2x8x128xf32, #tpu.memory_space<vmem>>, vector<1x8x128xf32>
    %1 = vector.shape_cast %0 : vector<1x8x128xf32> to vector<8x128xf32>
    %c0_2 = arith.constant 0 : index
    %2 = memref.load %arg2[%c0_2] : memref<2xf32, #tpu.memory_space<smem>>
    %3 = vector.broadcast %2 : f32 to vector<8x128xf32>
    %4 = arith.subf %1, %3 : vector<8x128xf32>
    %5 = arith.mulf %4, %4 : vector<8x128xf32>
    %c1 = arith.constant 1 : index
    %c0_3 = arith.constant 0 : index
    %c0_4 = arith.constant 0 : index
    %6 = vector.load %arg1[%c1, %c0_3, %c0_4] : memref<2x8x128xf32, #tpu.memory_space<vmem>>, vector<1x8x128xf32>
    %7 = vector.shape_cast %6 : vector<1x8x128xf32> to vector<8x128xf32>
    %c1_5 = arith.constant 1 : index
    %8 = memref.load %arg2[%c1_5] : memref<2xf32, #tpu.memory_space<smem>>
    %9 = vector.broadcast %8 : f32 to vector<8x128xf32>
    %10 = arith.subf %7, %9 : vector<8x128xf32>
    %11 = arith.mulf %10, %10 : vector<8x128xf32>
    %12 = arith.addf %5, %11 : vector<8x128xf32>
    %c0_6 = arith.constant 0 : index
    %13 = memref.load %arg3[%c0_6] : memref<8xf32, #tpu.memory_space<smem>>
    %c4 = arith.constant 4 : index
    %14 = memref.load %arg3[%c4] : memref<8xf32, #tpu.memory_space<smem>>
    %15 = vector.broadcast %14 : f32 to vector<8x128xf32>
    %16 = arith.mulf %12, %15 : vector<8x128xf32>
    %cst = arith.constant 0.000000e+00 : f32
    %17 = vector.broadcast %cst : f32 to vector<8x128xf32>
    %18 = arith.subf %17, %16 : vector<8x128xf32>
    %19 = math.exp %18 : vector<8x128xf32>
    %20 = vector.broadcast %13 : f32 to vector<8x128xf32>
    %21 = arith.mulf %20, %19 : vector<8x128xf32>
    %c0_7 = arith.constant 0 : index
    %c0_8 = arith.constant 0 : index
    %c0_9 = arith.constant 0 : index
    %22 = vector.load %arg4[%c0_7, %c0_8, %c0_9] : memref<4x8x128xf32, #tpu.memory_space<vmem>>, vector<1x8x128xf32>
    %23 = vector.shape_cast %22 : vector<1x8x128xf32> to vector<8x128xf32>
    %24 = vector.shape_cast %21 : vector<8x128xf32> to vector<1x8x128xf32>
    tpu.vector_store %arg4[%c0_7, %c0_8, %c0_9], %24 {strides = array<i32>} : memref<4x8x128xf32, #tpu.memory_space<vmem>>, vector<1x8x128xf32>,
    %c1_10 = arith.constant 1 : index
    %25 = memref.load %arg3[%c1_10] : memref<8xf32, #tpu.memory_space<smem>>
    %c5 = arith.constant 5 : index
    %26 = memref.load %arg3[%c5] : memref<8xf32, #tpu.memory_space<smem>>
    %27 = vector.broadcast %26 : f32 to vector<8x128xf32>
    %28 = arith.mulf %12, %27 : vector<8x128xf32>
    %cst_11 = arith.constant 0.000000e+00 : f32
    %29 = vector.broadcast %cst_11 : f32 to vector<8x128xf32>
    %30 = arith.subf %29, %28 : vector<8x128xf32>
    %31 = math.exp %30 : vector<8x128xf32>
    %32 = vector.broadcast %25 : f32 to vector<8x128xf32>
    %33 = arith.mulf %32, %31 : vector<8x128xf32>
    %c1_12 = arith.constant 1 : index
    %c0_13 = arith.constant 0 : index
    %c0_14 = arith.constant 0 : index
    %34 = vector.load %arg4[%c1_12, %c0_13, %c0_14] : memref<4x8x128xf32, #tpu.memory_space<vmem>>, vector<1x8x128xf32>
    %35 = vector.shape_cast %34 : vector<1x8x128xf32> to vector<8x128xf32>
    %36 = vector.shape_cast %33 : vector<8x128xf32> to vector<1x8x128xf32>
    tpu.vector_store %arg4[%c1_12, %c0_13, %c0_14], %36 {strides = array<i32>} : memref<4x8x128xf32, #tpu.memory_space<vmem>>, vector<1x8x128xf32>,
    %c2 = arith.constant 2 : index
    %37 = memref.load %arg3[%c2] : memref<8xf32, #tpu.memory_space<smem>>
    %c6 = arith.constant 6 : index
    %38 = memref.load %arg3[%c6] : memref<8xf32, #tpu.memory_space<smem>>
    %39 = vector.broadcast %38 : f32 to vector<8x128xf32>
    %40 = arith.mulf %12, %39 : vector<8x128xf32>
    %cst_15 = arith.constant 0.000000e+00 : f32
    %41 = vector.broadcast %cst_15 : f32 to vector<8x128xf32>
    %42 = arith.subf %41, %40 : vector<8x128xf32>
    %43 = math.exp %42 : vector<8x128xf32>
    %44 = vector.broadcast %37 : f32 to vector<8x128xf32>
    %45 = arith.mulf %44, %43 : vector<8x128xf32>
    %c2_16 = arith.constant 2 : index
    %c0_17 = arith.constant 0 : index
    %c0_18 = arith.constant 0 : index
    %46 = vector.load %arg4[%c2_16, %c0_17, %c0_18] : memref<4x8x128xf32, #tpu.memory_space<vmem>>, vector<1x8x128xf32>
    %47 = vector.shape_cast %46 : vector<1x8x128xf32> to vector<8x128xf32>
    %48 = vector.shape_cast %45 : vector<8x128xf32> to vector<1x8x128xf32>
    tpu.vector_store %arg4[%c2_16, %c0_17, %c0_18], %48 {strides = array<i32>} : memref<4x8x128xf32, #tpu.memory_space<vmem>>, vector<1x8x128xf32>,
    %c3 = arith.constant 3 : index
    %49 = memref.load %arg3[%c3] : memref<8xf32, #tpu.memory_space<smem>>
    %c7 = arith.constant 7 : index
    %50 = memref.load %arg3[%c7] : memref<8xf32, #tpu.memory_space<smem>>
    %51 = vector.broadcast %50 : f32 to vector<8x128xf32>
    %52 = arith.mulf %12, %51 : vector<8x128xf32>
    %cst_19 = arith.constant 0.000000e+00 : f32
    %53 = vector.broadcast %cst_19 : f32 to vector<8x128xf32>
    %54 = arith.subf %53, %52 : vector<8x128xf32>
    %55 = math.exp %54 : vector<8x128xf32>
    %56 = vector.broadcast %49 : f32 to vector<8x128xf32>
    %57 = arith.mulf %56, %55 : vector<8x128xf32>
    %c3_20 = arith.constant 3 : index
    %c0_21 = arith.constant 0 : index
    %c0_22 = arith.constant 0 : index
    %58 = vector.load %arg4[%c3_20, %c0_21, %c0_22] : memref<4x8x128xf32, #tpu.memory_space<vmem>>, vector<1x8x128xf32>
    %59 = vector.shape_cast %58 : vector<1x8x128xf32> to vector<8x128xf32>
    %60 = vector.shape_cast %57 : vector<8x128xf32> to vector<1x8x128xf32>
    tpu.vector_store %arg4[%c3_20, %c0_21, %c0_22], %60 {strides = array<i32>} : memref<4x8x128xf32, #tpu.memory_space<vmem>>, vector<1x8x128xf32>,
    return
  }
  func.func @transform_0(%arg0: i32) -> (i32, i32, i32) {
    %c0_i32 = arith.constant 0 : i32
    %c0_i32_0 = arith.constant 0 : i32
    %c0_i32_1 = arith.constant 0 : i32
    return %c0_i32, %arg0, %c0_i32_0 : i32, i32, i32
  }
  func.func @transform_1(%arg0: i32) -> i32 {
    %c0_i32 = arith.constant 0 : i32
    %c0_i32_0 = arith.constant 0 : i32
    return %c0_i32 : i32
  }
  func.func @transform_2(%arg0: i32) -> i32 {
    %c0_i32 = arith.constant 0 : i32
    %c0_i32_0 = arith.constant 0 : i32
    return %c0_i32 : i32
  }
  func.func @transform_3(%arg0: i32) -> (i32, i32, i32) {
    %c0_i32 = arith.constant 0 : i32
    %c0_i32_0 = arith.constant 0 : i32
    %c0_i32_1 = arith.constant 0 : i32
    return %c0_i32, %arg0, %c0_i32_0 : i32, i32, i32
  }
}

</mosaic_0001>

<llo_original>
// kernel: div.3
$region0: #{div.3}
  #allocation0 [shape = 's32[1]{0}', space=sflag, size = 0x4, scoped, tag = 'scoped memory for div.3']
  %s0 = inlined_call_operand.vmem [shape: f32[2,2], index: 0, kind: input, shape index: {}]
  %s1 = inlined_call_operand.vmem [shape: f32[2,2], index: 1, kind: input, shape index: {}]
  %s2 = inlined_call_operand.vmem [shape: f32[2,2], index: 2, kind: output, shape index: {}]
  %v3 = vld [vmem:[%s0] sm:$0x3]
  %v4 = vld [vmem:[%s1] sm:$0x3]
  %5 = xla_tuple %v3, %v4
  %6 = xla_tuple %5
  %v7 = vrcp.pop %v4
  %v8 = vmul.f32 %v3, %v7
  %9 = xla_tuple %v8
  %10 = vst [vmem:[%s2] sm:$0x3] %v8

// kernel: division_kernel_forward.1
$region0: #{division_kernel_forward.1}
  #allocation0 [shape = 'u32[]', space=smem, size = 0x4, offset = 0x4, fixed_abs, tag = 'smem constant byte address 0x4 - core index']
  #allocation1 [shape = 'u32[144,128]{1,0:T(1,128)}', space=vmem, size = 0x12000, scoped, tag = 'internal scratch']
  %s0 = inlined_call_operand.vmem [shape: f32[2,8,128], index: 0, kind: input, shape index: {}]
  %s1 = inlined_call_operand.vmem [shape: f32[2], index: 1, kind: input, shape index: {}]
  %s2 = inlined_call_operand.vmem [shape: f32[8], index: 2, kind: input, shape index: {}]
  %s3 = inlined_call_operand.vmem [shape: f32[4,8,128], index: 3, kind: output, shape index: {}]
  %s4 = sld [smem:[#allocation0]]
  $region30: #{division_kernel_forward.1} parent=0
    _
  %s6 = ssub.s32 1, %s4
  %s7 = scalar_select 0, %s6, %s4
  $region1: #{division_kernel_forward.1} parent=0
    #allocation2 [shape = 'u8[512]{0}', space=smem, size = 0x200, scoped, tag = 'input window, operand 1, single buffered']
    #allocation3 [shape = 's32[1]{0}', space=sflag, size = 0x4, scoped, tag = 'scoped memory for division_kernel_forward.1']
    #allocation4 [shape = 'u8[512]{0}', space=smem, size = 0x200, scoped, tag = 'input window, operand 2, single buffered']
    #allocation5 [shape = 's32[1]{0}', space=sflag, size = 0x4, scoped, tag = 'scoped memory for division_kernel_forward.1']
    %8 = vsyncpa [#allocation3], 0
    %9 = vsyncpa [#allocation5], 0
    // Predicated region
    $region2: #{division_kernel_forward.1} parent=1 // pred_check
      _
    $region3: #{division_kernel_forward.1} parent=1 // pred_check_branch
      %11 = sbr.rel (0) target = $region5
    $region4: #{division_kernel_forward.1} parent=1 // pred_region
      _
    $region5: #{division_kernel_forward.1} parent=1 // pred_fallthru
      _
    // Predicated region
    $region6: #{division_kernel_forward.1} parent=1 // pred_check
      _
    $region7: #{division_kernel_forward.1} parent=1 // pred_check_branch
      %13 = sbr.rel (0) target = $region9
    $region8: #{division_kernel_forward.1} parent=1 // pred_region
      %s15 = ssub.s32 16, 16
      %16 = vsyncadd [#allocation3], %s15
      %s18 = sshll.u32 %s1, 4
      %s19 = int_to_ptr.vmem [resolvable:$true] %s18
      %21 = dma.vmem_to_smem %s19, 16, [#allocation2], [#allocation3]
    $region9: #{division_kernel_forward.1} parent=1 // pred_fallthru
      _
    // Predicated region
    $region10: #{division_kernel_forward.1} parent=1 // pred_check
      _
    $region11: #{division_kernel_forward.1} parent=1 // pred_check_branch
      %23 = sbr.rel (0) target = $region13
    $region12: #{division_kernel_forward.1} parent=1 // pred_region
      %s25 = ssub.s32 16, 16
      %26 = vsyncadd [#allocation5], %s25
      %s28 = sshll.u32 %s2, 4
      %s29 = int_to_ptr.vmem [resolvable:$true] %s28
      %31 = dma.vmem_to_smem %s29, 16, [#allocation4], [#allocation5]
    $region13: #{division_kernel_forward.1} parent=1 // pred_fallthru
      _
    // Predicated region
    $region14: #{division_kernel_forward.1} parent=1 // pred_check
      _
    $region15: #{division_kernel_forward.1} parent=1 // pred_check_branch
      %33 = sbr.rel (0) target = $region17
    $region16: #{division_kernel_forward.1} parent=1 // pred_region
      %34 = dma.done [#allocation3], 16
    $region17: #{division_kernel_forward.1} parent=1 // pred_fallthru
      _
    // Predicated region
    $region18: #{division_kernel_forward.1} parent=1 // pred_check
      _
    $region19: #{division_kernel_forward.1} parent=1 // pred_check_branch
      %36 = sbr.rel (0) target = $region21
    $region20: #{division_kernel_forward.1} parent=1 // pred_region
      %37 = dma.done [#allocation5], 16
    $region21: #{division_kernel_forward.1} parent=1 // pred_fallthru
      _
    %38 = sfence
    %v39 = vld [vmem:[%s0] sm:$0xff]
    %s40 = sld [smem:[#allocation2]]
    %v41 = vstv %s40
    %v42 = vsub.f32 %v39, %v41
    %v43 = vmul.f32 %v42, %v42
    %s44 = scalar_lea.vmem %s0, 8
    %v45 = vld [vmem:[%s44] sm:$0xff]
    %s46 = sld [smem:[#allocation2 + $0x1]]
    %v47 = vstv %s46
    %v48 = vsub.f32 %v45, %v47
    %v49 = vmul.f32 %v48, %v48
    %v50 = vadd.f32 %v43, %v49
    %s51 = sld [smem:[#allocation4]]
    %s52 = sld [smem:[#allocation4 + $0x4]]
    %v53 = vstv %s52
    %v54 = vmul.f32 %v50, %v53
    %v55 = vsub.f32 0.0, %v54
    %v56 = vmul.f32 %v55, 1.442695
    %v57 = vpow.pop %v56
    %v58 = vstv %s51
    %v59 = vmul.f32 %v58, %v57
    %60 = vst [vmem:[%s3] sm:$0xff] %v59
    %s61 = sld [smem:[#allocation4 + $0x1]]
    %s62 = sld [smem:[#allocation4 + $0x5]]
    %v63 = vstv %s62
    %v64 = vmul.f32 %v50, %v63
    %v65 = vsub.f32 0.0, %v64
    %v66 = vmul.f32 %v65, 1.442695
    %v67 = vpow.pop %v66
    %v68 = vstv %s61
    %v69 = vmul.f32 %v68, %v67
    %s70 = scalar_lea.vmem %s3, 8
    %71 = vst [vmem:[%s70] sm:$0xff] %v69
    %s72 = sld [smem:[#allocation4 + $0x2]]
    %s73 = sld [smem:[#allocation4 + $0x6]]
    %v74 = vstv %s73
    %v75 = vmul.f32 %v50, %v74
    %v76 = vsub.f32 0.0, %v75
    %v77 = vmul.f32 %v76, 1.442695
    %v78 = vpow.pop %v77
    %v79 = vstv %s72
    %v80 = vmul.f32 %v79, %v78
    %s81 = scalar_lea.vmem %s3, 16
    %82 = vst [vmem:[%s81] sm:$0xff] %v80
    %s83 = sld [smem:[#allocation4 + $0x3]]
    %s84 = sld [smem:[#allocation4 + $0x7]]
    %v85 = vstv %s84
    %v86 = vmul.f32 %v50, %v85
    %v87 = vsub.f32 0.0, %v86
    %v88 = vmul.f32 %v87, 1.442695
    %v89 = vpow.pop %v88
    %v90 = vstv %s83
    %v91 = vmul.f32 %v90, %v89
    %s92 = scalar_lea.vmem %s3, 24
    %93 = vst [vmem:[%s92] sm:$0xff] %v91
    // Predicated region
    $region22: #{division_kernel_forward.1} parent=1 // pred_check
      _
    $region23: #{division_kernel_forward.1} parent=1 // pred_check_branch
      %95 = sbr.rel (0) target = $region25
    $region24: #{division_kernel_forward.1} parent=1 // pred_region
      _
    $region25: #{division_kernel_forward.1} parent=1 // pred_fallthru
      _
    // Predicated region
    $region26: #{division_kernel_forward.1} parent=1 // pred_check
      _
    $region27: #{division_kernel_forward.1} parent=1 // pred_check_branch
      %97 = sbr.rel (0) target = $region29
    $region28: #{division_kernel_forward.1} parent=1 // pred_region
      _
    $region29: #{division_kernel_forward.1} parent=1 // pred_fallthru
      _
    %98 = vsyncpa [#allocation3], 1
    %99 = vsyncpa [#allocation5], 1

</llo_original>
